<compile_context>
chip_gen: v6e
topology: v6e:2x2x1
jax: 0.10.0
libtpu: 0.0.40
codegen_flags: <defaults>
</compile_context>

<pallas_src>
import math

import jax
import jax.numpy as jnp
from jax.experimental import pallas as pl
from jax.experimental.pallas import tpu as pltpu


def affine_kernel(x_ref, alpha_ref, beta_ref, out_ref):
    # x_ref: (TR, TD); alpha_ref/beta_ref: (1, TD) broadcast over rows (pure VPU).
    # jnp promotion keeps the math in f32 when alpha/beta are f32 and x is bf16.
    y = x_ref[...] * alpha_ref[...] + beta_ref[...]
    out_ref[...] = y.astype(out_ref.dtype)


def _sublane_multiple(dtype) -> int:
    itemsize = jnp.dtype(dtype).itemsize
    return {4: 8, 2: 16, 1: 32}.get(itemsize, 8)


def _choose_tiles(rows, d, dtype, target_tile_bytes=1 << 20,
                  min_rows=256, max_rows=2048):
    """Pick (row_block, d_block) so one x tile is roughly target_tile_bytes."""
    itemsize = jnp.dtype(dtype).itemsize
    sublane = _sublane_multiple(dtype)

    # Lane axis: keep the full width unless D is so wide that >= min_rows rows
    # would blow the tile budget; then take the largest 128-multiple divisor
    # of D that fits (keeps full-width stores, avoids tiny row blocks).
    d_block = d
    if d % 128 == 0:
        max_d = max(128, (target_tile_bytes // (min_rows * itemsize)) // 128 * 128)
        if d > max_d:
            d_block = 128
            for cand in range(128, max_d + 1, 128):
                if d % cand == 0:
                    d_block = cand

    # Sublane axis: fill the budget, rounded down to the dtype sublane multiple.
    row_block = target_tile_bytes // (d_block * itemsize)
    row_block = (row_block // sublane) * sublane
    row_block = max(sublane, min(row_block, max_rows))
    if rows <= row_block:
        row_block = rows  # a single full-extent block is always a legal layout
    return row_block, d_block


def affine_pallas(x, alpha, beta, *, row_block=None, d_block=None,
                  donate_x=False):
    """y = alpha * x + beta, broadcasting alpha/beta over all but the last axis."""
    orig_shape = x.shape
    D = orig_shape[-1]
    rows = math.prod(orig_shape[:-1]) if len(orig_shape) > 1 else 1

    # Layout plumbing in the wrapper (free): present a lane-dense 2-D slab.
    x2 = x.reshape(rows, D)
    a2 = alpha.reshape(1, D)
    b2 = beta.reshape(1, D)

    auto_rb, auto_db = _choose_tiles(rows, D, x.dtype)
    if row_block is None:
        row_block = auto_rb
    if d_block is None:
        d_block = auto_db
    row_block = min(row_block, rows)
    d_block = min(d_block, D)

    # Non-divisible shapes are fine: the trailing block is masked by Pallas.
    grid = (pl.cdiv(rows, row_block), pl.cdiv(D, d_block))

    kwargs = {}
    if donate_x:
        # Write the result into x's buffer (caller should donate x); removes the
        # extra HBM output allocation, bytes moved are unchanged.
        kwargs["input_output_aliases"] = {0: 0}

    out = pl.pallas_call(
        affine_kernel,
        out_shape=jax.ShapeDtypeStruct((rows, D), x.dtype),
        grid_spec=pl.GridSpec(
            grid=grid,
            in_specs=[
                # If DMA is still exposed on v7x, add pipeline_mode=pl.Buffered(3) here.
                pl.BlockSpec((row_block, d_block), lambda i, j: (i, j)),  # x tile
                pl.BlockSpec((1, d_block), lambda i, j: (0, j)),          # alpha (resident per D-slice)
                pl.BlockSpec((1, d_block), lambda i, j: (0, j)),          # beta
            ],
            out_specs=pl.BlockSpec((row_block, d_block), lambda i, j: (i, j)),
        ),
        compiler_params=pltpu.CompilerParams(
            dimension_semantics=("parallel", "parallel"),
        ),
        **kwargs,
    )(x2, a2, b2)
    return out.reshape(orig_shape)


def affine_ref(x, alpha, beta):
    """Pure-JAX reference mirroring torch.addcmul(beta, alpha, x)."""
    return (beta + alpha * x.astype(jnp.float32)).astype(x.dtype)


if __name__ == "__main__":
    key = jax.random.PRNGKey(0)
    kx, ka, kb, ky = jax.random.split(key, 4)

    # ---- case 1: f32, lane-aligned, divisible rows (module-typical layout) ----
    B, H, W, D = 2, 16, 16, 128
    x = jax.random.normal(kx, (B, H, W, D), jnp.float32)
    # Module init is alpha=1e-7, beta=0; use random values so the check is non-trivial.
    alpha = 1e-7 + 0.1 * jax.random.normal(ka, (1, 1, 1, D), jnp.float32)
    beta = 0.1 * jax.random.normal(kb, (1, 1, 1, D), jnp.float32)

    out = jax.block_until_ready(affine_pallas(x, alpha, beta))
    ref = affine_ref(x, alpha, beta)
    assert out.shape == x.shape
    assert bool(jnp.all(jnp.isfinite(out)))
    assert bool(jnp.allclose(out, ref, rtol=1e-6, atol=1e-6))

    # ---- case 2: bf16 activations, ragged row count, explicit small row block
    # (exercises mixed-precision promotion, multi-step pipelined grid, and the
    #  masked trailing block) ----
    B2, H2, W2 = 2, 13, 16            # rows = 416, not a multiple of 128
    x_bf16 = jax.random.normal(ky, (B2, H2, W2, D), jnp.float32).astype(jnp.bfloat16)
    out2 = jax.block_until_ready(
        affine_pallas(x_bf16, alpha, beta, row_block=128))
    ref2 = affine_ref(x_bf16, alpha, beta)
    assert out2.shape == x_bf16.shape
    assert out2.dtype == jnp.bfloat16
    assert bool(jnp.all(jnp.isfinite(out2.astype(jnp.float32))))
    assert bool(jnp.allclose(out2.astype(jnp.float32), ref2.astype(jnp.float32),
                             rtol=1e-2, atol=1e-2))

    print("KERNEL_OK")
</pallas_src>

<mosaic_0001>
module attributes {stable_mosaic.version = 11 : i64} {
  func.func @affine_kernel(%arg0: i32, %arg1: i32, %arg2: memref<512x128xf32, #tpu.memory_space<vmem>>, %arg3: memref<1x128xf32, #tpu.memory_space<vmem>>, %arg4: memref<1x128xf32, #tpu.memory_space<vmem>>, %arg5: memref<512x128xf32, #tpu.memory_space<vmem>>) attributes {dimension_semantics = [#tpu.dimension_semantics<parallel>, #tpu.dimension_semantics<parallel>], iteration_bounds = array<i64: 1, 1>, scalar_prefetch = 0 : i64, scratch_operands = 0 : i64, tpu.core_type = #tpu.core_type<tc>, window_params = [{transform_indices = @transform_0, window_bounds = array<i64: 512, 128>}, {transform_indices = @transform_1, window_bounds = array<i64: 1, 128>}, {transform_indices = @transform_2, window_bounds = array<i64: 1, 128>}, {transform_indices = @transform_3, window_bounds = array<i64: 512, 128>}]} {
    %c0 = arith.constant 0 : index
    %c0_0 = arith.constant 0 : index
    %0 = vector.load %arg2[%c0, %c0_0] : memref<512x128xf32, #tpu.memory_space<vmem>>, vector<512x128xf32>
    %c0_1 = arith.constant 0 : index
    %c0_2 = arith.constant 0 : index
    %1 = vector.load %arg3[%c0_1, %c0_2] : memref<1x128xf32, #tpu.memory_space<vmem>>, vector<1x128xf32>
    %2 = vector.broadcast %1 : vector<1x128xf32> to vector<512x128xf32>
    %3 = arith.mulf %0, %2 : vector<512x128xf32>
    %c0_3 = arith.constant 0 : index
    %c0_4 = arith.constant 0 : index
    %4 = vector.load %arg4[%c0_3, %c0_4] : memref<1x128xf32, #tpu.memory_space<vmem>>, vector<1x128xf32>
    %5 = vector.broadcast %4 : vector<1x128xf32> to vector<512x128xf32>
    %6 = arith.addf %3, %5 : vector<512x128xf32>
    %c0_5 = arith.constant 0 : index
    %c0_6 = arith.constant 0 : index
    %7 = vector.load %arg5[%c0_5, %c0_6] : memref<512x128xf32, #tpu.memory_space<vmem>>, vector<512x128xf32>
    tpu.vector_store %arg5[%c0_5, %c0_6], %6 {strides = array<i32>} : memref<512x128xf32, #tpu.memory_space<vmem>>, vector<512x128xf32>,
    return
  }
  func.func @transform_0(%arg0: i32, %arg1: i32) -> (i32, i32) {
    %c0_i32 = arith.constant 0 : i32
    return %arg0, %arg1 : i32, i32
  }
  func.func @transform_1(%arg0: i32, %arg1: i32) -> (i32, i32) {
    %c0_i32 = arith.constant 0 : i32
    %c0_i32_0 = arith.constant 0 : i32
    return %c0_i32, %arg1 : i32, i32
  }
  func.func @transform_2(%arg0: i32, %arg1: i32) -> (i32, i32) {
    %c0_i32 = arith.constant 0 : i32
    %c0_i32_0 = arith.constant 0 : i32
    return %c0_i32, %arg1 : i32, i32
  }
  func.func @transform_3(%arg0: i32, %arg1: i32) -> (i32, i32) {
    %c0_i32 = arith.constant 0 : i32
    return %arg0, %arg1 : i32, i32
  }
}

</mosaic_0001>

<llo_original>
// kernel: tpu_custom_call.1
$region0: #{tpu_custom_call.1}
  #allocation0 [shape = 'u32[]', space=smem, size = 0x4, offset = 0x4, fixed_abs, tag = 'smem constant byte address 0x4 - core index']
  #allocation1 [shape = 'u32[144,128]{1,0:T(1,128)}', space=vmem, size = 0x12000, scoped, tag = 'internal scratch']
  %s0 = inlined_call_operand.hbm [shape: f32[512,128], index: 0, kind: input, shape index: {}]
  %s1 = inlined_call_operand.vmem [shape: f32[1,128], index: 1, kind: input, shape index: {}]
  %s2 = inlined_call_operand.vmem [shape: f32[1,128], index: 2, kind: input, shape index: {}]
  %s3 = inlined_call_operand.hbm [shape: f32[512,128], index: 3, kind: output, shape index: {}]
  %s4 = sld [smem:[#allocation0]]
  $region26: #{tpu_custom_call.1} parent=0
    _
  %s6 = ssub.s32 1, %s4
  %s7 = scalar_select 0, %s6, %s4
  $region1: #{tpu_custom_call.1} parent=0
    #allocation2 [shape = 'u8[262144]{0}', space=vmem, size = 0x40000, scoped, tag = 'input window, operand 0, single buffered']
    #allocation3 [shape = 's32[1]{0}', space=sflag, size = 0x4, scoped, tag = 'scoped memory for tpu_custom_call.1']
    #allocation4 [shape = 's32[1]{0}', space=sflag, size = 0x4, scoped, tag = 'scoped memory for tpu_custom_call.1']
    #allocation5 [shape = 'u8[262144]{0}', space=vmem, size = 0x40000, scoped, tag = 'output window, operand 0, single buffered']
    %8 = vsyncpa [#allocation3], 0
    %9 = vsyncpa [#allocation4], 0
    // Predicated region
    $region2: #{tpu_custom_call.1} parent=1 // pred_check
      _
    $region3: #{tpu_custom_call.1} parent=1 // pred_check_branch
      %11 = sbr.rel (0) target = $region5
    $region4: #{tpu_custom_call.1} parent=1 // pred_region
      %s13 = ssub.s32 8192, 8192
      %14 = vsyncadd [#allocation3], %s13
      %s15 = sshll.u32 [#allocation2], 4
      %s16 = int_to_ptr.vmem [resolvable:$true] %s15
      %21 = dma.hbm_to_vmem [thread:$0]  %s0, 8192, %s16, [#allocation3], 128, 128, 8
    $region5: #{tpu_custom_call.1} parent=1 // pred_fallthru
      _
    // Predicated region
    $region6: #{tpu_custom_call.1} parent=1 // pred_check
      _
    $region7: #{tpu_custom_call.1} parent=1 // pred_check_branch
      %23 = sbr.rel (0) target = $region9
    $region8: #{tpu_custom_call.1} parent=1 // pred_region
      _
    $region9: #{tpu_custom_call.1} parent=1 // pred_fallthru
      _
    // Predicated region
    $region10: #{tpu_custom_call.1} parent=1 // pred_check
      _
    $region11: #{tpu_custom_call.1} parent=1 // pred_check_branch
      %25 = sbr.rel (0) target = $region13
    $region12: #{tpu_custom_call.1} parent=1 // pred_region
      _
    $region13: #{tpu_custom_call.1} parent=1 // pred_fallthru
      _
    // Predicated region
    $region14: #{tpu_custom_call.1} parent=1 // pred_check
      _
    $region15: #{tpu_custom_call.1} parent=1 // pred_check_branch
      %27 = sbr.rel (0) target = $region17
    $region16: #{tpu_custom_call.1} parent=1 // pred_region
      %28 = dma.done [#allocation3], 8192
    $region17: #{tpu_custom_call.1} parent=1 // pred_fallthru
      _
    %v29 = vld [vmem:[#allocation2] sm:$0xff]
    %v30 = vld [vmem:[#allocation2 + $0x8] sm:$0xff]
    %v31 = vld [vmem:[#allocation2 + $0x10] sm:$0xff]
    %v32 = vld [vmem:[#allocation2 + $0x18] sm:$0xff]
    %v33 = vld [vmem:[#allocation2 + $0x20] sm:$0xff]
    %v34 = vld [vmem:[#allocation2 + $0x28] sm:$0xff]
    %v35 = vld [vmem:[#allocation2 + $0x30] sm:$0xff]
    %v36 = vld [vmem:[#allocation2 + $0x38] sm:$0xff]
    %v37 = vld [vmem:[#allocation2 + $0x40] sm:$0xff]
    %v38 = vld [vmem:[#allocation2 + $0x48] sm:$0xff]
    %v39 = vld [vmem:[#allocation2 + $0x50] sm:$0xff]
    %v40 = vld [vmem:[#allocation2 + $0x58] sm:$0xff]
    %v41 = vld [vmem:[#allocation2 + $0x60] sm:$0xff]
    %v42 = vld [vmem:[#allocation2 + $0x68] sm:$0xff]
    %v43 = vld [vmem:[#allocation2 + $0x70] sm:$0xff]
    %v44 = vld [vmem:[#allocation2 + $0x78] sm:$0xff]
    %v45 = vld [vmem:[#allocation2 + $0x80] sm:$0xff]
    %v46 = vld [vmem:[#allocation2 + $0x88] sm:$0xff]
    %v47 = vld [vmem:[#allocation2 + $0x90] sm:$0xff]
    %v48 = vld [vmem:[#allocation2 + $0x98] sm:$0xff]
    %v49 = vld [vmem:[#allocation2 + $0xa0] sm:$0xff]
    %v50 = vld [vmem:[#allocation2 + $0xa8] sm:$0xff]
    %v51 = vld [vmem:[#allocation2 + $0xb0] sm:$0xff]
    %v52 = vld [vmem:[#allocation2 + $0xb8] sm:$0xff]
    %v53 = vld [vmem:[#allocation2 + $0xc0] sm:$0xff]
    %v54 = vld [vmem:[#allocation2 + $0xc8] sm:$0xff]
    %v55 = vld [vmem:[#allocation2 + $0xd0] sm:$0xff]
    %v56 = vld [vmem:[#allocation2 + $0xd8] sm:$0xff]
    %v57 = vld [vmem:[#allocation2 + $0xe0] sm:$0xff]
    %v58 = vld [vmem:[#allocation2 + $0xe8] sm:$0xff]
    %v59 = vld [vmem:[#allocation2 + $0xf0] sm:$0xff]
    %v60 = vld [vmem:[#allocation2 + $0xf8] sm:$0xff]
    %v61 = vld [vmem:[#allocation2 + $0x100] sm:$0xff]
    %v62 = vld [vmem:[#allocation2 + $0x108] sm:$0xff]
    %v63 = vld [vmem:[#allocation2 + $0x110] sm:$0xff]
    %v64 = vld [vmem:[#allocation2 + $0x118] sm:$0xff]
    %v65 = vld [vmem:[#allocation2 + $0x120] sm:$0xff]
    %v66 = vld [vmem:[#allocation2 + $0x128] sm:$0xff]
    %v67 = vld [vmem:[#allocation2 + $0x130] sm:$0xff]
    %v68 = vld [vmem:[#allocation2 + $0x138] sm:$0xff]
    %v69 = vld [vmem:[#allocation2 + $0x140] sm:$0xff]
    %v70 = vld [vmem:[#allocation2 + $0x148] sm:$0xff]
    %v71 = vld [vmem:[#allocation2 + $0x150] sm:$0xff]
    %v72 = vld [vmem:[#allocation2 + $0x158] sm:$0xff]
    %v73 = vld [vmem:[#allocation2 + $0x160] sm:$0xff]
    %v74 = vld [vmem:[#allocation2 + $0x168] sm:$0xff]
    %v75 = vld [vmem:[#allocation2 + $0x170] sm:$0xff]
    %v76 = vld [vmem:[#allocation2 + $0x178] sm:$0xff]
    %v77 = vld [vmem:[#allocation2 + $0x180] sm:$0xff]
    %v78 = vld [vmem:[#allocation2 + $0x188] sm:$0xff]
    %v79 = vld [vmem:[#allocation2 + $0x190] sm:$0xff]
    %v80 = vld [vmem:[#allocation2 + $0x198] sm:$0xff]
    %v81 = vld [vmem:[#allocation2 + $0x1a0] sm:$0xff]
    %v82 = vld [vmem:[#allocation2 + $0x1a8] sm:$0xff]
    %v83 = vld [vmem:[#allocation2 + $0x1b0] sm:$0xff]
    %v84 = vld [vmem:[#allocation2 + $0x1b8] sm:$0xff]
    %v85 = vld [vmem:[#allocation2 + $0x1c0] sm:$0xff]
    %v86 = vld [vmem:[#allocation2 + $0x1c8] sm:$0xff]
    %v87 = vld [vmem:[#allocation2 + $0x1d0] sm:$0xff]
    %v88 = vld [vmem:[#allocation2 + $0x1d8] sm:$0xff]
    %v89 = vld [vmem:[#allocation2 + $0x1e0] sm:$0xff]
    %v90 = vld [vmem:[#allocation2 + $0x1e8] sm:$0xff]
    %v91 = vld [vmem:[#allocation2 + $0x1f0] sm:$0xff]
    %v92 = vld [vmem:[#allocation2 + $0x1f8] sm:$0xff]
    %v93 = vld [vmem:[%s1] sm:$0x1]
    %v95 = vlaneseq
    %v96 = vshrl.u32 %v95, 7
    %v97 = vsub.s32 0, %v96
    %v98 = vrot.slane %v93, %v97
    %v100 = vmul.f32 %v29, %v98
    %v101 = vmul.f32 %v30, %v98
    %v102 = vmul.f32 %v31, %v98
    %v103 = vmul.f32 %v32, %v98
    %v104 = vmul.f32 %v33, %v98
    %v105 = vmul.f32 %v34, %v98
    %v106 = vmul.f32 %v35, %v98
    %v107 = vmul.f32 %v36, %v98
    %v108 = vmul.f32 %v37, %v98
    %v109 = vmul.f32 %v38, %v98
    %v110 = vmul.f32 %v39, %v98
    %v111 = vmul.f32 %v40, %v98
    %v112 = vmul.f32 %v41, %v98
    %v113 = vmul.f32 %v42, %v98
    %v114 = vmul.f32 %v43, %v98
    %v115 = vmul.f32 %v44, %v98
    %v116 = vmul.f32 %v45, %v98
    %v117 = vmul.f32 %v46, %v98
    %v118 = vmul.f32 %v47, %v98
    %v119 = vmul.f32 %v48, %v98
    %v120 = vmul.f32 %v49, %v98
    %v121 = vmul.f32 %v50, %v98
    %v122 = vmul.f32 %v51, %v98
    %v123 = vmul.f32 %v52, %v98
    %v124 = vmul.f32 %v53, %v98
    %v125 = vmul.f32 %v54, %v98
    %v126 = vmul.f32 %v55, %v98
    %v127 = vmul.f32 %v56, %v98
    %v128 = vmul.f32 %v57, %v98
    %v129 = vmul.f32 %v58, %v98
    %v130 = vmul.f32 %v59, %v98
    %v131 = vmul.f32 %v60, %v98
    %v132 = vmul.f32 %v61, %v98
    %v133 = vmul.f32 %v62, %v98
    %v134 = vmul.f32 %v63, %v98
    %v135 = vmul.f32 %v64, %v98
    %v136 = vmul.f32 %v65, %v98
    %v137 = vmul.f32 %v66, %v98
    %v138 = vmul.f32 %v67, %v98
    %v139 = vmul.f32 %v68, %v98
    %v140 = vmul.f32 %v69, %v98
    %v141 = vmul.f32 %v70, %v98
    %v142 = vmul.f32 %v71, %v98
    %v143 = vmul.f32 %v72, %v98
    %v144 = vmul.f32 %v73, %v98
    %v145 = vmul.f32 %v74, %v98
    %v146 = vmul.f32 %v75, %v98
    %v147 = vmul.f32 %v76, %v98
    %v148 = vmul.f32 %v77, %v98
    %v149 = vmul.f32 %v78, %v98
    %v150 = vmul.f32 %v79, %v98
    %v151 = vmul.f32 %v80, %v98
    %v152 = vmul.f32 %v81, %v98
    %v153 = vmul.f32 %v82, %v98
    %v154 = vmul.f32 %v83, %v98
    %v155 = vmul.f32 %v84, %v98
    %v156 = vmul.f32 %v85, %v98
    %v157 = vmul.f32 %v86, %v98
    %v158 = vmul.f32 %v87, %v98
    %v159 = vmul.f32 %v88, %v98
    %v160 = vmul.f32 %v89, %v98
    %v161 = vmul.f32 %v90, %v98
    %v162 = vmul.f32 %v91, %v98
    %v163 = vmul.f32 %v92, %v98
    %v164 = vld [vmem:[%s2] sm:$0x1]
    %v166 = vlaneseq
    %v167 = vshrl.u32 %v166, 7
    %v168 = vsub.s32 0, %v167
    %v169 = vrot.slane %v164, %v168
    %v171 = vadd.f32 %v100, %v169
    %v172 = vadd.f32 %v101, %v169
    %v173 = vadd.f32 %v102, %v169
    %v174 = vadd.f32 %v103, %v169
    %v175 = vadd.f32 %v104, %v169
    %v176 = vadd.f32 %v105, %v169
    %v177 = vadd.f32 %v106, %v169
    %v178 = vadd.f32 %v107, %v169
    %v179 = vadd.f32 %v108, %v169
    %v180 = vadd.f32 %v109, %v169
    %v181 = vadd.f32 %v110, %v169
    %v182 = vadd.f32 %v111, %v169
    %v183 = vadd.f32 %v112, %v169
    %v184 = vadd.f32 %v113, %v169
    %v185 = vadd.f32 %v114, %v169
    %v186 = vadd.f32 %v115, %v169
    %v187 = vadd.f32 %v116, %v169
    %v188 = vadd.f32 %v117, %v169
    %v189 = vadd.f32 %v118, %v169
    %v190 = vadd.f32 %v119, %v169
    %v191 = vadd.f32 %v120, %v169
    %v192 = vadd.f32 %v121, %v169
    %v193 = vadd.f32 %v122, %v169
    %v194 = vadd.f32 %v123, %v169
    %v195 = vadd.f32 %v124, %v169
    %v196 = vadd.f32 %v125, %v169
    %v197 = vadd.f32 %v126, %v169
    %v198 = vadd.f32 %v127, %v169
    %v199 = vadd.f32 %v128, %v169
    %v200 = vadd.f32 %v129, %v169
    %v201 = vadd.f32 %v130, %v169
    %v202 = vadd.f32 %v131, %v169
    %v203 = vadd.f32 %v132, %v169
    %v204 = vadd.f32 %v133, %v169
    %v205 = vadd.f32 %v134, %v169
    %v206 = vadd.f32 %v135, %v169
    %v207 = vadd.f32 %v136, %v169
    %v208 = vadd.f32 %v137, %v169
    %v209 = vadd.f32 %v138, %v169
    %v210 = vadd.f32 %v139, %v169
    %v211 = vadd.f32 %v140, %v169
    %v212 = vadd.f32 %v141, %v169
    %v213 = vadd.f32 %v142, %v169
    %v214 = vadd.f32 %v143, %v169
    %v215 = vadd.f32 %v144, %v169
    %v216 = vadd.f32 %v145, %v169
    %v217 = vadd.f32 %v146, %v169
    %v218 = vadd.f32 %v147, %v169
    %v219 = vadd.f32 %v148, %v169
    %v220 = vadd.f32 %v149, %v169
    %v221 = vadd.f32 %v150, %v169
    %v222 = vadd.f32 %v151, %v169
    %v223 = vadd.f32 %v152, %v169
    %v224 = vadd.f32 %v153, %v169
    %v225 = vadd.f32 %v154, %v169
    %v226 = vadd.f32 %v155, %v169
    %v227 = vadd.f32 %v156, %v169
    %v228 = vadd.f32 %v157, %v169
    %v229 = vadd.f32 %v158, %v169
    %v230 = vadd.f32 %v159, %v169
    %v231 = vadd.f32 %v160, %v169
    %v232 = vadd.f32 %v161, %v169
    %v233 = vadd.f32 %v162, %v169
    %v234 = vadd.f32 %v163, %v169
    %235 = vst [vmem:[#allocation5] sm:$0xff] %v171
    %236 = vst [vmem:[#allocation5 + $0x8] sm:$0xff] %v172
    %237 = vst [vmem:[#allocation5 + $0x10] sm:$0xff] %v173
    %238 = vst [vmem:[#allocation5 + $0x18] sm:$0xff] %v174
    %239 = vst [vmem:[#allocation5 + $0x20] sm:$0xff] %v175
    %240 = vst [vmem:[#allocation5 + $0x28] sm:$0xff] %v176
    %241 = vst [vmem:[#allocation5 + $0x30] sm:$0xff] %v177
    %242 = vst [vmem:[#allocation5 + $0x38] sm:$0xff] %v178
    %243 = vst [vmem:[#allocation5 + $0x40] sm:$0xff] %v179
    %244 = vst [vmem:[#allocation5 + $0x48] sm:$0xff] %v180
    %245 = vst [vmem:[#allocation5 + $0x50] sm:$0xff] %v181
    %246 = vst [vmem:[#allocation5 + $0x58] sm:$0xff] %v182
    %247 = vst [vmem:[#allocation5 + $0x60] sm:$0xff] %v183
    %248 = vst [vmem:[#allocation5 + $0x68] sm:$0xff] %v184
    %249 = vst [vmem:[#allocation5 + $0x70] sm:$0xff] %v185
    %250 = vst [vmem:[#allocation5 + $0x78] sm:$0xff] %v186
    %251 = vst [vmem:[#allocation5 + $0x80] sm:$0xff] %v187
    %252 = vst [vmem:[#allocation5 + $0x88] sm:$0xff] %v188
    %253 = vst [vmem:[#allocation5 + $0x90] sm:$0xff] %v189
    %254 = vst [vmem:[#allocation5 + $0x98] sm:$0xff] %v190
    %255 = vst [vmem:[#allocation5 + $0xa0] sm:$0xff] %v191
    %256 = vst [vmem:[#allocation5 + $0xa8] sm:$0xff] %v192
    %257 = vst [vmem:[#allocation5 + $0xb0] sm:$0xff] %v193
    %258 = vst [vmem:[#allocation5 + $0xb8] sm:$0xff] %v194
    %259 = vst [vmem:[#allocation5 + $0xc0] sm:$0xff] %v195
    %260 = vst [vmem:[#allocation5 + $0xc8] sm:$0xff] %v196
    %261 = vst [vmem:[#allocation5 + $0xd0] sm:$0xff] %v197
    %262 = vst [vmem:[#allocation5 + $0xd8] sm:$0xff] %v198
    %263 = vst [vmem:[#allocation5 + $0xe0] sm:$0xff] %v199
    %264 = vst [vmem:[#allocation5 + $0xe8] sm:$0xff] %v200
    %265 = vst [vmem:[#allocation5 + $0xf0] sm:$0xff] %v201
    %266 = vst [vmem:[#allocation5 + $0xf8] sm:$0xff] %v202
    %267 = vst [vmem:[#allocation5 + $0x100] sm:$0xff] %v203
    %268 = vst [vmem:[#allocation5 + $0x108] sm:$0xff] %v204
    %269 = vst [vmem:[#allocation5 + $0x110] sm:$0xff] %v205
    %270 = vst [vmem:[#allocation5 + $0x118] sm:$0xff] %v206
    %271 = vst [vmem:[#allocation5 + $0x120] sm:$0xff] %v207
    %272 = vst [vmem:[#allocation5 + $0x128] sm:$0xff] %v208
    %273 = vst [vmem:[#allocation5 + $0x130] sm:$0xff] %v209
    %274 = vst [vmem:[#allocation5 + $0x138] sm:$0xff] %v210
    %275 = vst [vmem:[#allocation5 + $0x140] sm:$0xff] %v211
    %276 = vst [vmem:[#allocation5 + $0x148] sm:$0xff] %v212
    %277 = vst [vmem:[#allocation5 + $0x150] sm:$0xff] %v213
    %278 = vst [vmem:[#allocation5 + $0x158] sm:$0xff] %v214
    %279 = vst [vmem:[#allocation5 + $0x160] sm:$0xff] %v215
    %280 = vst [vmem:[#allocation5 + $0x168] sm:$0xff] %v216
    %281 = vst [vmem:[#allocation5 + $0x170] sm:$0xff] %v217
    %282 = vst [vmem:[#allocation5 + $0x178] sm:$0xff] %v218
    %283 = vst [vmem:[#allocation5 + $0x180] sm:$0xff] %v219
    %284 = vst [vmem:[#allocation5 + $0x188] sm:$0xff] %v220
    %285 = vst [vmem:[#allocation5 + $0x190] sm:$0xff] %v221
    %286 = vst [vmem:[#allocation5 + $0x198] sm:$0xff] %v222
    %287 = vst [vmem:[#allocation5 + $0x1a0] sm:$0xff] %v223
    %288 = vst [vmem:[#allocation5 + $0x1a8] sm:$0xff] %v224
    %289 = vst [vmem:[#allocation5 + $0x1b0] sm:$0xff] %v225
    %290 = vst [vmem:[#allocation5 + $0x1b8] sm:$0xff] %v226
    %291 = vst [vmem:[#allocation5 + $0x1c0] sm:$0xff] %v227
    %292 = vst [vmem:[#allocation5 + $0x1c8] sm:$0xff] %v228
    %293 = vst [vmem:[#allocation5 + $0x1d0] sm:$0xff] %v229
    %294 = vst [vmem:[#allocation5 + $0x1d8] sm:$0xff] %v230
    %295 = vst [vmem:[#allocation5 + $0x1e0] sm:$0xff] %v231
    %296 = vst [vmem:[#allocation5 + $0x1e8] sm:$0xff] %v232
    %297 = vst [vmem:[#allocation5 + $0x1f0] sm:$0xff] %v233
    %298 = vst [vmem:[#allocation5 + $0x1f8] sm:$0xff] %v234
    // Predicated region
    $region18: #{tpu_custom_call.1} parent=1 // pred_check
      _
    $region19: #{tpu_custom_call.1} parent=1 // pred_check_branch
      %300 = sbr.rel (0) target = $region21
    $region20: #{tpu_custom_call.1} parent=1 // pred_region
      %s302 = ssub.s32 8192, 8192
      %303 = vsyncadd [#allocation4], %s302
      %s304 = sshll.u32 [#allocation5], 4
      %s305 = int_to_ptr.vmem [resolvable:$true] %s304
      %310 = dma.vmem_to_hbm [thread:$0]  %s305, 8192, %s3, [#allocation4], 128, 128, 8
    $region21: #{tpu_custom_call.1} parent=1 // pred_fallthru
      _
    // Predicated region
    $region22: #{tpu_custom_call.1} parent=1 // pred_check
      _
    $region23: #{tpu_custom_call.1} parent=1 // pred_check_branch
      %312 = sbr.rel (0) target = $region25
    $region24: #{tpu_custom_call.1} parent=1 // pred_region
      %313 = dma.done [#allocation4], 8192
    $region25: #{tpu_custom_call.1} parent=1 // pred_fallthru
      _
    %314 = vsyncpa [#allocation3], 1
    %315 = vsyncpa [#allocation4], 1

</llo_original>
